<compile_context>
chip_gen: v6e
topology: v6e:2x2x1
jax: 0.10.0
libtpu: 0.0.40
codegen_flags: <defaults>
</compile_context>

<pallas_src>
import functools

import jax
import jax.numpy as jnp
from jax.experimental import pallas as pl
from jax.experimental.pallas import tpu as pltpu


_LANE = 128
_SUBLANE = 8


def _round_up(x, m):
    return ((x + m - 1) // m) * m


def _shrinkage_kernel(pred_ref, targ_ref, out_ref, *, a, c, inv_n):
    """Grid = (hw_tiles [parallel], row_blocks [reduction, last])."""
    i = pl.program_id(1)  # reduction axis over fused (N, C) row blocks

    @pl.when(i == 0)
    def _():
        out_ref[...] = jnp.zeros_like(out_ref)

    p = pred_ref[...].astype(jnp.float32)
    t = targ_ref[...].astype(jnp.float32)
    l1 = jnp.abs(p - t)
    l2 = l1 * l1
    # 1 / (1 + exp(a * (c - l1))) == sigmoid(a * (l1 - c)); the tanh form runs
    # on the EUP slot and avoids the multi-op VPU fp32 divide sequence.
    gate = 0.5 * (jnp.tanh((0.5 * a) * (l1 - c)) + 1.0)
    loss = l2 * gate

    # Fold this block's fused rows into the VMEM-resident output tile.
    out_ref[...] += jnp.sum(loss, axis=0, keepdims=True)

    @pl.when(i == pl.num_programs(1) - 1)
    def _():
        # Sum over C is folded into the row reduction; divide by N for mean.
        out_ref[...] = out_ref[...] * inv_n


def regression_shrinkage_loss(predictions, targets, a=10.0, c=0.2):
    """Pallas TPU implementation for 4D NCHW inputs. Returns an (H, W) array."""
    assert predictions.shape == targets.shape
    assert predictions.ndim == 4, "this kernel handles 4D NCHW inputs"
    n, ch, h, w = predictions.shape
    rows = n * ch
    hw = h * w
    in_dtype = predictions.dtype
    itemsize = jnp.dtype(in_dtype).itemsize

    # ---- lane-dense spatial tiling (parallel grid axis) ---------------------
    hw_tile = min(_round_up(hw, _LANE), 2048)
    hw_pad = _round_up(hw, hw_tile)
    num_hw_tiles = hw_pad // hw_tile
    # If the whole spatial extent fits one large tile, split it in two (only
    # when that adds no padding) so v7x megacore can use both TensorCores.
    if (num_hw_tiles == 1 and hw_pad == hw and hw_tile >= 8 * _LANE
            and hw_tile % (2 * _LANE) == 0):
        hw_tile //= 2
        num_hw_tiles = 2

    # ---- fused (N, C) row block (reduction axis, last) ----------------------
    # ~2 MiB per input block: 2 inputs x 2 pipeline buffers stays well inside
    # v5e's 16 MiB scoped default and v7x's 64 MiB physical VMEM.
    in_block_budget = 2 * 1024 * 1024
    b_rows = max(_SUBLANE,
                 (in_block_budget // (hw_tile * itemsize)) // _SUBLANE * _SUBLANE)
    b_rows = min(b_rows, _round_up(rows, _SUBLANE))
    rows_pad = _round_up(rows, b_rows)
    num_row_blocks = rows_pad // b_rows

    # ---- wrapper-side layout plumbing (zero padding contributes zero loss) --
    pred_f = predictions.reshape(rows, hw)
    targ_f = targets.reshape(rows, hw)
    if rows_pad != rows or hw_pad != hw:
        pad = ((0, rows_pad - rows), (0, hw_pad - hw))
        pred_f = jnp.pad(pred_f, pad)
        targ_f = jnp.pad(targ_f, pad)

    kernel = functools.partial(
        _shrinkage_kernel, a=float(a), c=float(c), inv_n=1.0 / float(n)
    )

    in_block_bytes = b_rows * hw_tile * itemsize
    out_block_bytes = hw_tile * 4
    vmem_limit = int(min(max(8 * in_block_bytes + 4 * out_block_bytes + (2 << 20),
                             8 << 20),
                         32 << 20))

    out = pl.pallas_call(
        kernel,
        out_shape=jax.ShapeDtypeStruct((1, hw_pad), jnp.float32),
        grid_spec=pltpu.PrefetchScalarGridSpec(
            num_scalar_prefetch=0,
            grid=(num_hw_tiles, num_row_blocks),  # reduction axis last
            in_specs=[
                pl.BlockSpec((b_rows, hw_tile), lambda j, i: (i, j)),
                pl.BlockSpec((b_rows, hw_tile), lambda j, i: (i, j)),
            ],
            # Output block index ignores the reduction axis -> stays VMEM
            # resident across it and doubles as the accumulator (no scratch).
            out_specs=pl.BlockSpec((1, hw_tile), lambda j, i: (0, j)),
        ),
        compiler_params=pltpu.CompilerParams(
            dimension_semantics=("parallel", "arbitrary"),
            vmem_limit_bytes=vmem_limit,
        ),
    )(pred_f, targ_f)

    return out[0, :hw].reshape(h, w)


def _reference(predictions, targets, a=10.0, c=0.2):
    l1 = jnp.abs(predictions - targets)
    l2 = l1 ** 2
    loss = l2 / (1.0 + jnp.exp(a * (c - l1)))
    if loss.ndim > 1:
        loss = loss.sum(axis=1)
    return jnp.mean(loss, axis=0)


if __name__ == "__main__":
    key = jax.random.PRNGKey(0)
    k1, k2 = jax.random.split(key)
    # Small NCHW shapes: batch=2, channels=4, spatial=16x16.
    predictions = jax.random.normal(k1, (2, 4, 16, 16), dtype=jnp.float32)
    targets = jax.random.normal(k2, (2, 4, 16, 16), dtype=jnp.float32)

    out = regression_shrinkage_loss(predictions, targets, a=10.0, c=0.2)
    out = jax.block_until_ready(out)

    ref = _reference(predictions, targets, a=10.0, c=0.2)
    assert out.shape == ref.shape == (16, 16)
    # tanh-based sigmoid vs exp-based reference differ at ~1e-6 fp32 level.
    assert jnp.allclose(out, ref, atol=2e-5, rtol=2e-5)

    print("KERNEL_OK")
</pallas_src>

<mosaic_0001>
module attributes {stable_mosaic.version = 11 : i64} {
  func.func @_shrinkage_kernel(%arg0: i32, %arg1: i32, %arg2: memref<8x256xf32, #tpu.memory_space<vmem>>, %arg3: memref<8x256xf32, #tpu.memory_space<vmem>>, %arg4: memref<1x256xf32, #tpu.memory_space<vmem>>) attributes {dimension_semantics = [#tpu.dimension_semantics<parallel>, #tpu.dimension_semantics<arbitrary>], iteration_bounds = array<i64: 1, 1>, scalar_prefetch = 0 : i64, scratch_operands = 0 : i64, tpu.core_type = #tpu.core_type<tc>, window_params = [{transform_indices = @transform_0, window_bounds = array<i64: 8, 256>}, {transform_indices = @transform_1, window_bounds = array<i64: 8, 256>}, {transform_indices = @transform_2, window_bounds = array<i64: 1, 256>}]} {
    %c0_i32 = arith.constant 0 : i32
    %0 = arith.cmpi eq, %arg1, %c0_i32 : i32
    %1 = arith.extui %0 : i1 to i32
    %c0_i32_0 = arith.constant 0 : i32
    %2 = arith.cmpi ne, %1, %c0_i32_0 : i32
    scf.if %2 {
      %cst_14 = arith.constant 0.000000e+00 : f32
      %26 = vector.broadcast %cst_14 : f32 to vector<1x256xf32>
      %c0_15 = arith.constant 0 : index
      %c0_16 = arith.constant 0 : index
      %27 = vector.load %arg4[%c0_15, %c0_16] : memref<1x256xf32, #tpu.memory_space<vmem>>, vector<1x256xf32>
      tpu.vector_store %arg4[%c0_15, %c0_16], %26 {strides = array<i32>} : memref<1x256xf32, #tpu.memory_space<vmem>>, vector<1x256xf32>,
    } else {
    }
    %c0 = arith.constant 0 : index
    %c0_1 = arith.constant 0 : index
    %3 = vector.load %arg2[%c0, %c0_1] : memref<8x256xf32, #tpu.memory_space<vmem>>, vector<8x256xf32>
    %c0_2 = arith.constant 0 : index
    %c0_3 = arith.constant 0 : index
    %4 = vector.load %arg3[%c0_2, %c0_3] : memref<8x256xf32, #tpu.memory_space<vmem>>, vector<8x256xf32>
    %5 = arith.subf %3, %4 : vector<8x256xf32>
    %6 = math.absf %5 : vector<8x256xf32>
    %7 = arith.mulf %6, %6 : vector<8x256xf32>
    %cst = arith.constant 2.000000e-01 : f32
    %8 = vector.broadcast %cst : f32 to vector<8x256xf32>
    %9 = arith.subf %6, %8 : vector<8x256xf32>
    %cst_4 = arith.constant 5.000000e+00 : f32
    %10 = vector.broadcast %cst_4 : f32 to vector<8x256xf32>
    %11 = arith.mulf %10, %9 : vector<8x256xf32>
    %12 = math.tanh %11 : vector<8x256xf32>
    %cst_5 = arith.constant 1.000000e+00 : f32
    %13 = vector.broadcast %cst_5 : f32 to vector<8x256xf32>
    %14 = arith.addf %12, %13 : vector<8x256xf32>
    %cst_6 = arith.constant 5.000000e-01 : f32
    %15 = vector.broadcast %cst_6 : f32 to vector<8x256xf32>
    %16 = arith.mulf %15, %14 : vector<8x256xf32>
    %17 = arith.mulf %7, %16 : vector<8x256xf32>
    %c0_7 = arith.constant 0 : index
    %c0_8 = arith.constant 0 : index
    %18 = vector.load %arg4[%c0_7, %c0_8] : memref<1x256xf32, #tpu.memory_space<vmem>>, vector<1x256xf32>
    %cst_9 = arith.constant dense<0.000000e+00> : vector<256xf32>
    %19 = vector.multi_reduction <add>, %17, %cst_9 [0] : vector<8x256xf32> to vector<256xf32>
    %20 = vector.shape_cast %19 : vector<256xf32> to vector<1x256xf32>
    %21 = arith.addf %18, %20 : vector<1x256xf32>
    %c0_10 = arith.constant 0 : index
    %c0_11 = arith.constant 0 : index
    %22 = vector.load %arg4[%c0_10, %c0_11] : memref<1x256xf32, #tpu.memory_space<vmem>>, vector<1x256xf32>
    tpu.vector_store %arg4[%c0_10, %c0_11], %21 {strides = array<i32>} : memref<1x256xf32, #tpu.memory_space<vmem>>, vector<1x256xf32>,
    %c0_i32_12 = arith.constant 0 : i32
    %23 = arith.cmpi eq, %arg1, %c0_i32_12 : i32
    %24 = arith.extui %23 : i1 to i32
    %c0_i32_13 = arith.constant 0 : i32
    %25 = arith.cmpi ne, %24, %c0_i32_13 : i32
    scf.if %25 {
      %c0_14 = arith.constant 0 : index
      %c0_15 = arith.constant 0 : index
      %26 = vector.load %arg4[%c0_14, %c0_15] : memref<1x256xf32, #tpu.memory_space<vmem>>, vector<1x256xf32>
      %cst_16 = arith.constant 5.000000e-01 : f32
      %27 = vector.broadcast %cst_16 : f32 to vector<1x256xf32>
      %28 = arith.mulf %26, %27 : vector<1x256xf32>
      %c0_17 = arith.constant 0 : index
      %c0_18 = arith.constant 0 : index
      %29 = vector.load %arg4[%c0_17, %c0_18] : memref<1x256xf32, #tpu.memory_space<vmem>>, vector<1x256xf32>
      tpu.vector_store %arg4[%c0_17, %c0_18], %28 {strides = array<i32>} : memref<1x256xf32, #tpu.memory_space<vmem>>, vector<1x256xf32>,
    } else {
    }
    return
  }
  func.func @transform_0(%arg0: i32, %arg1: i32) -> (i32, i32) {
    %c0_i32 = arith.constant 0 : i32
    return %arg1, %arg0 : i32, i32
  }
  func.func @transform_1(%arg0: i32, %arg1: i32) -> (i32, i32) {
    %c0_i32 = arith.constant 0 : i32
    return %arg1, %arg0 : i32, i32
  }
  func.func @transform_2(%arg0: i32, %arg1: i32) -> (i32, i32) {
    %c0_i32 = arith.constant 0 : i32
    %c0_i32_0 = arith.constant 0 : i32
    return %c0_i32, %arg0 : i32, i32
  }
}

</mosaic_0001>

<llo_original>
// kernel: tpu_custom_call.1
$region0: #{tpu_custom_call.1}
  #allocation0 [shape = 'u32[]', space=smem, size = 0x4, offset = 0x4, fixed_abs, tag = 'smem constant byte address 0x4 - core index']
  #allocation1 [shape = 'u32[144,128]{1,0:T(1,128)}', space=vmem, size = 0x12000, scoped, tag = 'internal scratch']
  %s0 = inlined_call_operand.hbm [shape: f32[8,256], index: 0, kind: input, shape index: {}]
  %s1 = inlined_call_operand.hbm [shape: f32[8,256], index: 1, kind: input, shape index: {}]
  %s2 = inlined_call_operand.hbm [shape: f32[1,256], index: 2, kind: output, shape index: {}]
  %s3 = sld [smem:[#allocation0]]
  $region34: #{tpu_custom_call.1} parent=0
    _
  %s5 = ssub.s32 1, %s3
  %s6 = scalar_select 0, %s5, %s3
  $region1: #{tpu_custom_call.1} parent=0
    #allocation2 [shape = 'u8[8192]{0}', space=vmem, size = 0x2000, scoped, tag = 'input window, operand 0, single buffered']
    #allocation3 [shape = 's32[1]{0}', space=sflag, size = 0x4, scoped, tag = 'scoped memory for tpu_custom_call.1']
    #allocation4 [shape = 's32[1]{0}', space=sflag, size = 0x4, scoped, tag = 'scoped memory for tpu_custom_call.1']
    #allocation5 [shape = 'u8[8192]{0}', space=vmem, size = 0x2000, scoped, tag = 'input window, operand 1, single buffered']
    #allocation6 [shape = 's32[1]{0}', space=sflag, size = 0x4, scoped, tag = 'scoped memory for tpu_custom_call.1']
    #allocation7 [shape = 'u8[1024]{0}', space=vmem, size = 0x400, scoped, tag = 'output window, operand 0, single buffered']
    %7 = vsyncpa [#allocation3], 0
    %8 = vsyncpa [#allocation6], 0
    %9 = vsyncpa [#allocation4], 0
    // Predicated region
    $region2: #{tpu_custom_call.1} parent=1 // pred_check
      _
    $region3: #{tpu_custom_call.1} parent=1 // pred_check_branch
      %11 = sbr.rel (0) target = $region5
    $region4: #{tpu_custom_call.1} parent=1 // pred_region
      %s13 = ssub.s32 256, 256
      %14 = vsyncadd [#allocation3], %s13
      %s16 = sshll.u32 [#allocation2], 4
      %s17 = int_to_ptr.vmem [resolvable:$true] %s16
      %19 = dma.hbm_to_vmem [thread:$0]  %s0, 256, %s17, [#allocation3]
    $region5: #{tpu_custom_call.1} parent=1 // pred_fallthru
      _
    // Predicated region
    $region6: #{tpu_custom_call.1} parent=1 // pred_check
      _
    $region7: #{tpu_custom_call.1} parent=1 // pred_check_branch
      %21 = sbr.rel (0) target = $region9
    $region8: #{tpu_custom_call.1} parent=1 // pred_region
      %s23 = ssub.s32 256, 256
      %24 = vsyncadd [#allocation6], %s23
      %s26 = sshll.u32 [#allocation5], 4
      %s27 = int_to_ptr.vmem [resolvable:$true] %s26
      %29 = dma.hbm_to_vmem [thread:$0]  %s1, 256, %s27, [#allocation6]
    $region9: #{tpu_custom_call.1} parent=1 // pred_fallthru
      _
    // Predicated region
    $region10: #{tpu_custom_call.1} parent=1 // pred_check
      _
    $region11: #{tpu_custom_call.1} parent=1 // pred_check_branch
      %31 = sbr.rel (0) target = $region13
    $region12: #{tpu_custom_call.1} parent=1 // pred_region
      %32 = dma.done [#allocation3], 256
    $region13: #{tpu_custom_call.1} parent=1 // pred_fallthru
      _
    // Predicated region
    $region14: #{tpu_custom_call.1} parent=1 // pred_check
      _
    $region15: #{tpu_custom_call.1} parent=1 // pred_check_branch
      %34 = sbr.rel (0) target = $region17
    $region16: #{tpu_custom_call.1} parent=1 // pred_region
      %35 = dma.done [#allocation6], 256
    $region17: #{tpu_custom_call.1} parent=1 // pred_fallthru
      _
    %p36 = scmp.eq.s32.totalorder 0, 0
    // Predicated region
    $region18: #{tpu_custom_call.1} parent=1 // pred_check
      %p37 = pneg %p36
    $region19: #{tpu_custom_call.1} parent=1 // pred_check_branch
      %39 = sbr.rel (%p37) target = $region21
    $region20: #{tpu_custom_call.1} parent=1 // pred_region
      %v40 = vlaneseq
      %vm41 = vcmp.ge.s32.totalorder %v40, 0
      %vm42 = vcmp.lt.s32.totalorder %v40, 256
      %vm43 = vmand %vm41, %vm42
      %44 = vst.msk [vmem:[#allocation7] sm:$0x3] %vm43, 0.0
    $region21: #{tpu_custom_call.1} parent=1 // pred_fallthru
      _
    %v45 = vld [vmem:[#allocation2] sm:$0xff]
    %v46 = vld [vmem:[#allocation2 + $0x8] sm:$0xff]
    %v47 = vld [vmem:[#allocation5] sm:$0xff]
    %v48 = vld [vmem:[#allocation5 + $0x8] sm:$0xff]
    %v49 = vsub.f32 %v45, %v47
    %v50 = vsub.f32 %v46, %v48
    %v51 = vand.u32 2147483647, %v49
    %v52 = vand.u32 2147483647, %v50
    %v53 = vmul.f32 %v51, %v51
    %v54 = vmul.f32 %v52, %v52
    %v55 = vsub.f32 %v51, 0.2
    %v56 = vsub.f32 %v52, 0.2
    %v57 = vmul.f32 %v55, 5.0
    %v58 = vmul.f32 %v56, 5.0
    %v59 = vtanh.pop %v57
    %v60 = vtanh.pop %v58
    %v61 = vadd.f32 %v59, 1.0
    %v62 = vadd.f32 %v60, 1.0
    %v63 = vmul.f32 %v61, 0.5
    %v64 = vmul.f32 %v62, 0.5
    %v65 = vmul.f32 %v53, %v63
    %v66 = vmul.f32 %v54, %v64
    %v67 = vld [vmem:[#allocation7] sm:$0x3]
    %v68 = vrot.slane %v65, 4
    %v69 = vadd.f32 %v65, %v68
    %v70 = vrot.slane %v69, 2
    %v71 = vadd.f32 %v69, %v70
    %v72 = vrot.slane %v71, 1
    %v73 = vadd.f32 %v71, %v72
    %v74 = vrot.slane %v66, 4
    %v75 = vadd.f32 %v66, %v74
    %v76 = vrot.slane %v75, 2
    %v77 = vadd.f32 %v75, %v76
    %v78 = vrot.slane %v77, 1
    %v79 = vadd.f32 %v77, %v78
    %v82 = vcombine.low %v73, %v79
    %v84 = vunpack.c.l.s4 1966171168
    %v85 = vunpack.c.0.s8 %v84
    %v86 = vlaneseq
    %v87 = vshrl.u32 %v86, 7
    %v88 = vsub.s32 %v85, %v87
    %v89 = vrot.slane %v82, %v88
    %v91 = vunpack.c.l.s4 1966171168
    %v92 = vunpack.c.0.s8 %v91
    %v93 = vlaneseq
    %v94 = vshrl.u32 %v93, 7
    %v95 = vsub.s32 %v92, %v94
    %v96 = vrot.slane %v89, %v95
    %v98 = vadd.f32 %v67, %v96
    %v99 = vlaneseq
    %vm100 = vcmp.ge.s32.totalorder %v99, 0
    %vm101 = vcmp.lt.s32.totalorder %v99, 256
    %vm102 = vmand %vm100, %vm101
    %103 = vst.msk [vmem:[#allocation7] sm:$0x3] %vm102, %v98
    // Predicated region
    $region22: #{tpu_custom_call.1} parent=1 // pred_check
      %p104 = pneg %p36
    $region23: #{tpu_custom_call.1} parent=1 // pred_check_branch
      %106 = sbr.rel (%p104) target = $region25
    $region24: #{tpu_custom_call.1} parent=1 // pred_region
      %v107 = vld [vmem:[#allocation7] sm:$0x3]
      %v108 = vmul.f32 %v107, 0.5
      %109 = vst.msk [vmem:[#allocation7] sm:$0x3] %vm102, %v108
    $region25: #{tpu_custom_call.1} parent=1 // pred_fallthru
      _
    // Predicated region
    $region26: #{tpu_custom_call.1} parent=1 // pred_check
      _
    $region27: #{tpu_custom_call.1} parent=1 // pred_check_branch
      %111 = sbr.rel (0) target = $region29
    $region28: #{tpu_custom_call.1} parent=1 // pred_region
      %s113 = ssub.s32 32, 32
      %114 = vsyncadd [#allocation4], %s113
      %s116 = sshll.u32 [#allocation7], 4
      %s117 = int_to_ptr.vmem [resolvable:$true] %s116
      %119 = dma.vmem_to_hbm [thread:$0]  %s117, 32, %s2, [#allocation4]
    $region29: #{tpu_custom_call.1} parent=1 // pred_fallthru
      _
    // Predicated region
    $region30: #{tpu_custom_call.1} parent=1 // pred_check
      _
    $region31: #{tpu_custom_call.1} parent=1 // pred_check_branch
      %121 = sbr.rel (0) target = $region33
    $region32: #{tpu_custom_call.1} parent=1 // pred_region
      %122 = dma.done [#allocation4], 32
    $region33: #{tpu_custom_call.1} parent=1 // pred_fallthru
      _
    %123 = vsyncpa [#allocation3], 1
    %124 = vsyncpa [#allocation6], 1
    %125 = vsyncpa [#allocation4], 1

</llo_original>
